<compile_context>
chip_gen: v6e
topology: v6e:2x2x1
jax: 0.10.0
libtpu: 0.0.40
codegen_flags: <defaults>
</compile_context>

<pallas_src>
import math

import jax
import jax.numpy as jnp
from jax.experimental import pallas as pl
from jax.experimental.pallas import tpu as pltpu


def _round_up(x, m):
    return ((x + m - 1) // m) * m


def _cdiv(a, b):
    return (a + b - 1) // b


# -----------------------------------------------------------------------------
# Kernel: fused Linear -> Swish -> Linear -> Swish -> Linear for one
# (ensemble member, batch tile) pair.  All accumulation and Swish math in f32;
# only the MXU multiply operands are cast to the (possibly bf16) weight dtype.
# -----------------------------------------------------------------------------
def _mlp_kernel(x_ref, w1_ref, b1_ref, w2_ref, b2_ref, w3_ref, b3_ref, o_ref):
    # x is f32 in HBM; cast to the MXU feed dtype here (no wrapper-side cast
    # pass, and x read bytes stay at 4 B/elem).
    x = x_ref[...].astype(w1_ref.dtype)
    h = jnp.dot(x, w1_ref[...], preferred_element_type=jnp.float32)
    h = h + b1_ref[...]
    h = h * jax.nn.sigmoid(h)              # Swish in f32 (exp/recip on EUP)
    h = jnp.dot(h.astype(w2_ref.dtype), w2_ref[...],
                preferred_element_type=jnp.float32)
    h = h + b2_ref[...]
    h = h * jax.nn.sigmoid(h)
    o = jnp.dot(h.astype(w3_ref.dtype), w3_ref[...],
                preferred_element_type=jnp.float32)
    o_ref[...] = (o + b3_ref[...]).astype(o_ref.dtype)


# -----------------------------------------------------------------------------
# One-time parameter preparation (hoisted out of the per-call path).
# -----------------------------------------------------------------------------
def prepare_params(members, *, use_bf16=True, hidden_pad=128, lane=128):
    """Prepare an ensemble of E parameter sets for the Pallas kernel.

    members: list (length E) of [(W1, b1), (W2, b2), (W3, b3)] with W laid out
    as (in_features, out_features) and b as (out_features,) or (1, out_features).

    Hidden widths and the output head are zero-padded up to lane multiples
    (lane-dense activations / unmasked stores); padded entries are exact zeros
    so the f32 math is unchanged.  Weights optionally cast to bf16 (native MXU
    dtype on v6e/v7x); biases stay f32.
    """
    (w1_0, _), (w2_0, _), (w3_0, _) = members[0]
    in_dim = w1_0.shape[0]
    h1, h2, out_dim = w1_0.shape[1], w2_0.shape[1], w3_0.shape[1]
    h1p = _round_up(h1, hidden_pad)
    h2p = _round_up(h2, hidden_pad)
    out_pad = _round_up(out_dim, lane)
    w_dtype = jnp.bfloat16 if use_bf16 else jnp.float32

    def pad_wb(w, b, rows, cols):
        w = jnp.pad(w, ((0, rows - w.shape[0]), (0, cols - w.shape[1])))
        b = b.reshape(1, -1)
        b = jnp.pad(b, ((0, 0), (0, cols - b.shape[-1])))
        return w, b

    w1s, b1s, w2s, b2s, w3s, b3s = [], [], [], [], [], []
    for (mw1, mb1), (mw2, mb2), (mw3, mb3) in members:
        a, b = pad_wb(mw1, mb1, in_dim, h1p)
        w1s.append(a); b1s.append(b)
        a, b = pad_wb(mw2, mb2, h1p, h2p)
        w2s.append(a); b2s.append(b)
        a, b = pad_wb(mw3, mb3, h2p, out_pad)
        w3s.append(a); b3s.append(b)

    def stack(xs, dt):
        return jnp.stack(xs).astype(dt)

    return dict(
        w1=stack(w1s, w_dtype), b1=stack(b1s, jnp.float32),
        w2=stack(w2s, w_dtype), b2=stack(b2s, jnp.float32),
        w3=stack(w3s, w_dtype), b3=stack(b3s, jnp.float32),
        out_dim=out_dim, in_dim=in_dim,
    )


# -----------------------------------------------------------------------------
# Forward passes.
# -----------------------------------------------------------------------------
def ensemble_forward(x, prepped, *, tile_b=2048, out_dtype=jnp.bfloat16):
    """x: (E, B, in_dim) float32 -> (E, B, out_dim) in out_dtype."""
    w1, b1 = prepped["w1"], prepped["b1"]
    w2, b2 = prepped["w2"], prepped["b2"]
    w3, b3 = prepped["w3"], prepped["b3"]
    out_dim = prepped["out_dim"]
    E, B, in_dim = x.shape
    out_pad = w3.shape[-1]

    # Big batch tiles amortize the ~0.35 us/grid-step overhead, but clamp so
    # the batch axis still yields >= 2 grid steps when possible, so the
    # "parallel" axes can shard across v7x's two TensorCores even at E == 1.
    tile_b = max(8, min(_round_up(tile_b, 8), _round_up(_cdiv(B, 2), 8)))
    grid_b = _cdiv(B, tile_b)

    def wspec(a):
        # Full per-member block; constant across the batch axis -> VMEM
        # resident, re-fetched only when the member index e advances.
        return pl.BlockSpec((None,) + a.shape[1:], lambda e, i: (e, 0, 0))

    out = pl.pallas_call(
        _mlp_kernel,
        out_shape=jax.ShapeDtypeStruct((E, B, out_pad), out_dtype),
        grid=(E, grid_b),
        in_specs=[
            pl.BlockSpec((None, tile_b, in_dim), lambda e, i: (e, i, 0)),
            wspec(w1), wspec(b1),
            wspec(w2), wspec(b2),
            wspec(w3), wspec(b3),
        ],
        out_specs=pl.BlockSpec((None, tile_b, out_pad), lambda e, i: (e, i, 0)),
        compiler_params=pltpu.CompilerParams(
            # Both axes are independent (no cross-step accumulation).
            dimension_semantics=("parallel", "parallel"),
        ),
    )(x, w1, b1, w2, b2, w3, b3)

    # Only the (cheap) column slice of the 128-lane padded head remains; the
    # padded columns are exact zeros and the slice fuses with consumers
    # under jit.  No row slice is needed (cdiv grid, no row padding).
    return out[..., :out_dim]


def dynamics_mbpo_forward(x, prepped, *, tile_b=2048, out_dtype=jnp.bfloat16):
    """Single-network forward matching dynamicsNetwork_mbpo.forward.

    x: (B, nb_states + nb_actions) float32.  `prepped` must come from
    prepare_params([params]) (i.e. ensemble size E == 1).
    """
    assert prepped["w1"].shape[0] == 1, "use ensemble_forward for E > 1"
    return ensemble_forward(x[None], prepped, tile_b=tile_b,
                            out_dtype=out_dtype)[0]


# -----------------------------------------------------------------------------
# Reference / init helpers.
# -----------------------------------------------------------------------------
def init_linear(key, fan_in, fan_out):
    """Deterministic init mirroring torch nn.Linear default: U(+-1/sqrt(fan_in))."""
    kw, kb = jax.random.split(key)
    bound = 1.0 / math.sqrt(fan_in)
    w = jax.random.uniform(kw, (fan_in, fan_out), jnp.float32, -bound, bound)
    b = jax.random.uniform(kb, (1, fan_out), jnp.float32, -bound, bound)
    return w, b


def reference_forward(x, params):
    (w1, b1), (w2, b2), (w3, b3) = params
    swish = lambda t: t * jax.nn.sigmoid(t)
    h = swish(x @ w1 + b1.reshape(1, -1))
    h = swish(h @ w2 + b2.reshape(1, -1))
    return h @ w3 + b3.reshape(1, -1)


if __name__ == "__main__":
    # Small shapes consistent with the module: nb_states=16, nb_actions=16,
    # hidden_units=[64, 64] -> in_dim=32, out_dim=2*(16+1)=34.
    nb_states, nb_actions = 16, 16
    hidden_units = [64, 64]
    in_dim = nb_states + nb_actions
    out_dim = 2 * (nb_states + 1)

    key = jax.random.PRNGKey(0)
    k_members, kx, kxe = jax.random.split(key, 3)

    def make_member(k):
        k1, k2, k3 = jax.random.split(k, 3)
        return [init_linear(k1, in_dim, hidden_units[0]),
                init_linear(k2, hidden_units[0], hidden_units[1]),
                init_linear(k3, hidden_units[1], out_dim)]

    E = 4
    members = [make_member(mk) for mk in jax.random.split(k_members, E)]

    # 1) Single network, f32 weights + f32 output: matches reference closely
    #    (zero-padding of hidden/output widths does not change the math).
    prepped_f32 = prepare_params([members[0]], use_bf16=False)
    x = jax.random.normal(kx, (8, in_dim), jnp.float32)
    out = jax.block_until_ready(
        dynamics_mbpo_forward(x, prepped_f32, out_dtype=jnp.float32))
    ref = reference_forward(x, members[0])
    assert out.shape == (8, out_dim)
    assert jnp.allclose(out, ref, atol=1e-4, rtol=1e-4), "f32 path mismatch"

    # 2) Ragged batch (cdiv grid, masked boundary tile, no wrapper padding).
    out5 = jax.block_until_ready(
        dynamics_mbpo_forward(x[:5], prepped_f32, out_dtype=jnp.float32))
    assert out5.shape == (5, out_dim)
    assert jnp.allclose(out5, ref[:5], atol=1e-4, rtol=1e-4), "ragged mismatch"

    # 3) Default perf config: bf16 weights, in-kernel cast, bf16 output.
    prepped_bf16 = prepare_params([members[0]], use_bf16=True)
    out_bf = jax.block_until_ready(dynamics_mbpo_forward(x, prepped_bf16))
    assert out_bf.shape == (8, out_dim) and out_bf.dtype == jnp.bfloat16
    assert jnp.allclose(out_bf.astype(jnp.float32), ref, atol=5e-2, rtol=5e-2), \
        "bf16 path mismatch"

    # 4) Full MBPO ensemble in a single pallas_call (grid axis over E).
    prepped_ens = prepare_params(members, use_bf16=True)
    xe = jax.random.normal(kxe, (E, 16, in_dim), jnp.float32)
    out_e = jax.block_until_ready(ensemble_forward(xe, prepped_ens))
    assert out_e.shape == (E, 16, out_dim)
    for e in range(E):
        ref_e = reference_forward(xe[e], members[e])
        assert jnp.allclose(out_e[e].astype(jnp.float32), ref_e,
                            atol=5e-2, rtol=5e-2), f"ensemble member {e} mismatch"

    print("KERNEL_OK")
</pallas_src>

<mosaic_0001>
module attributes {stable_mosaic.version = 11 : i64} {
  func.func @_mlp_kernel(%arg0: i32, %arg1: i32, %arg2: memref<1x8x32xf32, #tpu.memory_space<vmem>>, %arg3: memref<1x32x128xf32, #tpu.memory_space<vmem>>, %arg4: memref<1x1x128xf32, #tpu.memory_space<vmem>>, %arg5: memref<1x128x128xf32, #tpu.memory_space<vmem>>, %arg6: memref<1x1x128xf32, #tpu.memory_space<vmem>>, %arg7: memref<1x128x128xf32, #tpu.memory_space<vmem>>, %arg8: memref<1x1x128xf32, #tpu.memory_space<vmem>>, %arg9: memref<1x8x128xf32, #tpu.memory_space<vmem>>) attributes {dimension_semantics = [#tpu.dimension_semantics<parallel>, #tpu.dimension_semantics<parallel>], iteration_bounds = array<i64: 1, 1>, scalar_prefetch = 0 : i64, scratch_operands = 0 : i64, tpu.core_type = #tpu.core_type<tc>, window_params = [{transform_indices = @transform_0, window_bounds = array<i64: 1, 8, 32>}, {transform_indices = @transform_1, window_bounds = array<i64: 1, 32, 128>}, {transform_indices = @transform_2, window_bounds = array<i64: 1, 1, 128>}, {transform_indices = @transform_3, window_bounds = array<i64: 1, 128, 128>}, {transform_indices = @transform_4, window_bounds = array<i64: 1, 1, 128>}, {transform_indices = @transform_5, window_bounds = array<i64: 1, 128, 128>}, {transform_indices = @transform_6, window_bounds = array<i64: 1, 1, 128>}, {transform_indices = @transform_7, window_bounds = array<i64: 1, 8, 128>}]} {
    %c0 = arith.constant 0 : index
    %c0_0 = arith.constant 0 : index
    %c0_1 = arith.constant 0 : index
    %0 = vector.load %arg2[%c0, %c0_0, %c0_1] : memref<1x8x32xf32, #tpu.memory_space<vmem>>, vector<1x8x32xf32>
    %1 = vector.shape_cast %0 : vector<1x8x32xf32> to vector<8x32xf32>
    %c0_2 = arith.constant 0 : index
    %c0_3 = arith.constant 0 : index
    %c0_4 = arith.constant 0 : index
    %2 = vector.load %arg3[%c0_2, %c0_3, %c0_4] : memref<1x32x128xf32, #tpu.memory_space<vmem>>, vector<1x32x128xf32>
    %3 = vector.shape_cast %2 : vector<1x32x128xf32> to vector<32x128xf32>
    %cst = arith.constant dense<0.000000e+00> : vector<8x128xf32>
    %4 = tpu.matmul %1, %3, %cst {dimension_numbers = #tpu.dot_dimension_numbers<[1], [0], [0], [1], [0, 0, 1, 1], [], []>} : vector<8x32xf32>, vector<32x128xf32>, vector<8x128xf32> -> vector<8x128xf32>
    %c0_5 = arith.constant 0 : index
    %c0_6 = arith.constant 0 : index
    %c0_7 = arith.constant 0 : index
    %5 = vector.load %arg4[%c0_5, %c0_6, %c0_7] : memref<1x1x128xf32, #tpu.memory_space<vmem>>, vector<1x1x128xf32>
    %6 = vector.shape_cast %5 : vector<1x1x128xf32> to vector<1x128xf32>
    %7 = vector.broadcast %6 : vector<1x128xf32> to vector<8x128xf32>
    %8 = arith.addf %4, %7 : vector<8x128xf32>
    %9 = arith.negf %8 : vector<8x128xf32>
    %10 = math.exp %9 : vector<8x128xf32>
    %cst_8 = arith.constant 1.000000e+00 : f32
    %11 = vector.broadcast %cst_8 : f32 to vector<8x128xf32>
    %12 = arith.addf %11, %10 : vector<8x128xf32>
    %13 = arith.divf %11, %12 : vector<8x128xf32>
    %14 = arith.mulf %8, %13 : vector<8x128xf32>
    %c0_9 = arith.constant 0 : index
    %c0_10 = arith.constant 0 : index
    %c0_11 = arith.constant 0 : index
    %15 = vector.load %arg5[%c0_9, %c0_10, %c0_11] : memref<1x128x128xf32, #tpu.memory_space<vmem>>, vector<1x128x128xf32>
    %16 = vector.shape_cast %15 : vector<1x128x128xf32> to vector<128x128xf32>
    %cst_12 = arith.constant dense<0.000000e+00> : vector<8x128xf32>
    %17 = tpu.matmul %14, %16, %cst_12 {dimension_numbers = #tpu.dot_dimension_numbers<[1], [0], [0], [1], [0, 0, 1, 1], [], []>} : vector<8x128xf32>, vector<128x128xf32>, vector<8x128xf32> -> vector<8x128xf32>
    %c0_13 = arith.constant 0 : index
    %c0_14 = arith.constant 0 : index
    %c0_15 = arith.constant 0 : index
    %18 = vector.load %arg6[%c0_13, %c0_14, %c0_15] : memref<1x1x128xf32, #tpu.memory_space<vmem>>, vector<1x1x128xf32>
    %19 = vector.shape_cast %18 : vector<1x1x128xf32> to vector<1x128xf32>
    %20 = vector.broadcast %19 : vector<1x128xf32> to vector<8x128xf32>
    %21 = arith.addf %17, %20 : vector<8x128xf32>
    %22 = arith.negf %21 : vector<8x128xf32>
    %23 = math.exp %22 : vector<8x128xf32>
    %cst_16 = arith.constant 1.000000e+00 : f32
    %24 = vector.broadcast %cst_16 : f32 to vector<8x128xf32>
    %25 = arith.addf %24, %23 : vector<8x128xf32>
    %26 = arith.divf %24, %25 : vector<8x128xf32>
    %27 = arith.mulf %21, %26 : vector<8x128xf32>
    %c0_17 = arith.constant 0 : index
    %c0_18 = arith.constant 0 : index
    %c0_19 = arith.constant 0 : index
    %28 = vector.load %arg7[%c0_17, %c0_18, %c0_19] : memref<1x128x128xf32, #tpu.memory_space<vmem>>, vector<1x128x128xf32>
    %29 = vector.shape_cast %28 : vector<1x128x128xf32> to vector<128x128xf32>
    %cst_20 = arith.constant dense<0.000000e+00> : vector<8x128xf32>
    %30 = tpu.matmul %27, %29, %cst_20 {dimension_numbers = #tpu.dot_dimension_numbers<[1], [0], [0], [1], [0, 0, 1, 1], [], []>} : vector<8x128xf32>, vector<128x128xf32>, vector<8x128xf32> -> vector<8x128xf32>
    %c0_21 = arith.constant 0 : index
    %c0_22 = arith.constant 0 : index
    %c0_23 = arith.constant 0 : index
    %31 = vector.load %arg8[%c0_21, %c0_22, %c0_23] : memref<1x1x128xf32, #tpu.memory_space<vmem>>, vector<1x1x128xf32>
    %32 = vector.shape_cast %31 : vector<1x1x128xf32> to vector<1x128xf32>
    %33 = vector.broadcast %32 : vector<1x128xf32> to vector<8x128xf32>
    %34 = arith.addf %30, %33 : vector<8x128xf32>
    %c0_24 = arith.constant 0 : index
    %c0_25 = arith.constant 0 : index
    %c0_26 = arith.constant 0 : index
    %35 = vector.load %arg9[%c0_24, %c0_25, %c0_26] : memref<1x8x128xf32, #tpu.memory_space<vmem>>, vector<1x8x128xf32>
    %36 = vector.shape_cast %35 : vector<1x8x128xf32> to vector<8x128xf32>
    %37 = vector.shape_cast %34 : vector<8x128xf32> to vector<1x8x128xf32>
    tpu.vector_store %arg9[%c0_24, %c0_25, %c0_26], %37 {strides = array<i32>} : memref<1x8x128xf32, #tpu.memory_space<vmem>>, vector<1x8x128xf32>,
    return
  }
  func.func @transform_0(%arg0: i32, %arg1: i32) -> (i32, i32, i32) {
    %c0_i32 = arith.constant 0 : i32
    %c0_i32_0 = arith.constant 0 : i32
    return %arg0, %arg1, %c0_i32 : i32, i32, i32
  }
  func.func @transform_1(%arg0: i32, %arg1: i32) -> (i32, i32, i32) {
    %c0_i32 = arith.constant 0 : i32
    %c0_i32_0 = arith.constant 0 : i32
    %c0_i32_1 = arith.constant 0 : i32
    return %arg0, %c0_i32, %c0_i32_0 : i32, i32, i32
  }
  func.func @transform_2(%arg0: i32, %arg1: i32) -> (i32, i32, i32) {
    %c0_i32 = arith.constant 0 : i32
    %c0_i32_0 = arith.constant 0 : i32
    %c0_i32_1 = arith.constant 0 : i32
    return %arg0, %c0_i32, %c0_i32_0 : i32, i32, i32
  }
  func.func @transform_3(%arg0: i32, %arg1: i32) -> (i32, i32, i32) {
    %c0_i32 = arith.constant 0 : i32
    %c0_i32_0 = arith.constant 0 : i32
    %c0_i32_1 = arith.constant 0 : i32
    return %arg0, %c0_i32, %c0_i32_0 : i32, i32, i32
  }
  func.func @transform_4(%arg0: i32, %arg1: i32) -> (i32, i32, i32) {
    %c0_i32 = arith.constant 0 : i32
    %c0_i32_0 = arith.constant 0 : i32
    %c0_i32_1 = arith.constant 0 : i32
    return %arg0, %c0_i32, %c0_i32_0 : i32, i32, i32
  }
  func.func @transform_5(%arg0: i32, %arg1: i32) -> (i32, i32, i32) {
    %c0_i32 = arith.constant 0 : i32
    %c0_i32_0 = arith.constant 0 : i32
    %c0_i32_1 = arith.constant 0 : i32
    return %arg0, %c0_i32, %c0_i32_0 : i32, i32, i32
  }
  func.func @transform_6(%arg0: i32, %arg1: i32) -> (i32, i32, i32) {
    %c0_i32 = arith.constant 0 : i32
    %c0_i32_0 = arith.constant 0 : i32
    %c0_i32_1 = arith.constant 0 : i32
    return %arg0, %c0_i32, %c0_i32_0 : i32, i32, i32
  }
  func.func @transform_7(%arg0: i32, %arg1: i32) -> (i32, i32, i32) {
    %c0_i32 = arith.constant 0 : i32
    %c0_i32_0 = arith.constant 0 : i32
    return %arg0, %arg1, %c0_i32 : i32, i32, i32
  }
}

</mosaic_0001>

<llo_original>
// kernel: tpu_custom_call.1
$region0: #{tpu_custom_call.1}
  #allocation0 [shape = 'u32[]', space=smem, size = 0x4, offset = 0x4, fixed_abs, tag = 'smem constant byte address 0x4 - core index']
  #allocation1 [shape = 'u32[144,128]{1,0:T(1,128)}', space=vmem, size = 0x12000, scoped, tag = 'internal scratch']
  %s0 = inlined_call_operand.hbm [shape: f32[1,8,32], index: 0, kind: input, shape index: {}]
  %s1 = inlined_call_operand.hbm [shape: f32[1,32,128], index: 1, kind: input, shape index: {}]
  %s2 = inlined_call_operand.vmem [shape: f32[1,1,128], index: 2, kind: input, shape index: {}]
  %s3 = inlined_call_operand.hbm [shape: f32[1,128,128], index: 3, kind: input, shape index: {}]
  %s4 = inlined_call_operand.vmem [shape: f32[1,1,128], index: 4, kind: input, shape index: {}]
  %s5 = inlined_call_operand.hbm [shape: f32[1,128,128], index: 5, kind: input, shape index: {}]
  %s6 = inlined_call_operand.vmem [shape: f32[1,1,128], index: 6, kind: input, shape index: {}]
  %s7 = inlined_call_operand.hbm [shape: f32[1,8,128], index: 7, kind: output, shape index: {}]
  %s8 = sld [smem:[#allocation0]]
  $region54: #{tpu_custom_call.1} parent=0
    _
  %s10 = ssub.s32 1, %s8
  %s11 = scalar_select 0, %s10, %s8
  $region1: #{tpu_custom_call.1} parent=0
    #allocation2 [shape = 'u8[4096]{0}', space=vmem, size = 0x1000, scoped, tag = 'input window, operand 0, single buffered']
    #allocation3 [shape = 's32[1]{0}', space=sflag, size = 0x4, scoped, tag = 'scoped memory for tpu_custom_call.1']
    #allocation4 [shape = 's32[1]{0}', space=sflag, size = 0x4, scoped, tag = 'scoped memory for tpu_custom_call.1']
    #allocation5 [shape = 'u8[16384]{0}', space=vmem, size = 0x4000, scoped, tag = 'input window, operand 1, single buffered']
    #allocation6 [shape = 's32[1]{0}', space=sflag, size = 0x4, scoped, tag = 'scoped memory for tpu_custom_call.1']
    #allocation7 [shape = 'u8[65536]{0}', space=vmem, size = 0x10000, scoped, tag = 'input window, operand 3, single buffered']
    #allocation8 [shape = 'u8[65536]{0}', space=vmem, size = 0x10000, scoped, tag = 'input window, operand 5, single buffered']
    #allocation9 [shape = 's32[1]{0}', space=sflag, size = 0x4, scoped, tag = 'scoped memory for tpu_custom_call.1']
    #allocation10 [shape = 'u8[4096]{0}', space=vmem, size = 0x1000, scoped, tag = 'output window, operand 0, single buffered']
    %12 = vsyncpa [#allocation3], 0
    %13 = vsyncpa [#allocation6], 0
    %14 = vsyncpa [#allocation9], 0
    %15 = vsyncpa [#allocation4], 0
    // Predicated region
    $region2: #{tpu_custom_call.1} parent=1 // pred_check
      _
    $region3: #{tpu_custom_call.1} parent=1 // pred_check_branch
      %17 = sbr.rel (0) target = $region5
    $region4: #{tpu_custom_call.1} parent=1 // pred_region
      %s19 = ssub.s32 128, 128
      %20 = vsyncadd [#allocation3], %s19
      %s22 = sshll.u32 [#allocation2], 4
      %s23 = int_to_ptr.vmem [resolvable:$true] %s22
      %25 = dma.hbm_to_vmem [thread:$0]  %s0, 128, %s23, [#allocation3]
    $region5: #{tpu_custom_call.1} parent=1 // pred_fallthru
      _
    // Predicated region
    $region6: #{tpu_custom_call.1} parent=1 // pred_check
      _
    $region7: #{tpu_custom_call.1} parent=1 // pred_check_branch
      %27 = sbr.rel (0) target = $region9
    $region8: #{tpu_custom_call.1} parent=1 // pred_region
      %s29 = ssub.s32 512, 512
      %30 = vsyncadd [#allocation6], %s29
      %s31 = sshll.u32 [#allocation5], 4
      %s32 = int_to_ptr.vmem [resolvable:$true] %s31
      %37 = dma.hbm_to_vmem [thread:$0]  %s1, 512, %s32, [#allocation6], 128, 128, 8
    $region9: #{tpu_custom_call.1} parent=1 // pred_fallthru
      _
    // Predicated region
    $region10: #{tpu_custom_call.1} parent=1 // pred_check
      _
    $region11: #{tpu_custom_call.1} parent=1 // pred_check_branch
      %39 = sbr.rel (0) target = $region13
    $region12: #{tpu_custom_call.1} parent=1 // pred_region
      _
    $region13: #{tpu_custom_call.1} parent=1 // pred_fallthru
      _
    // Predicated region
    $region14: #{tpu_custom_call.1} parent=1 // pred_check
      _
    $region15: #{tpu_custom_call.1} parent=1 // pred_check_branch
      %41 = sbr.rel (0) target = $region17
    $region16: #{tpu_custom_call.1} parent=1 // pred_region
      %s43 = ssub.s32 2048, 2048
      %44 = vsyncadd [#allocation6], %s43
      %s45 = sshll.u32 [#allocation7], 4
      %s46 = int_to_ptr.vmem [resolvable:$true] %s45
      %51 = dma.hbm_to_vmem [thread:$0]  %s3, 2048, %s46, [#allocation6], 128, 128, 8
    $region17: #{tpu_custom_call.1} parent=1 // pred_fallthru
      _
    // Predicated region
    $region18: #{tpu_custom_call.1} parent=1 // pred_check
      _
    $region19: #{tpu_custom_call.1} parent=1 // pred_check_branch
      %53 = sbr.rel (0) target = $region21
    $region20: #{tpu_custom_call.1} parent=1 // pred_region
      _
    $region21: #{tpu_custom_call.1} parent=1 // pred_fallthru
      _
    // Predicated region
    $region22: #{tpu_custom_call.1} parent=1 // pred_check
      _
    $region23: #{tpu_custom_call.1} parent=1 // pred_check_branch
      %55 = sbr.rel (0) target = $region25
    $region24: #{tpu_custom_call.1} parent=1 // pred_region
      %s57 = ssub.s32 2048, 2048
      %58 = vsyncadd [#allocation9], %s57
      %s59 = sshll.u32 [#allocation8], 4
      %s60 = int_to_ptr.vmem [resolvable:$true] %s59
      %65 = dma.hbm_to_vmem [thread:$0]  %s5, 2048, %s60, [#allocation9], 128, 128, 8
    $region25: #{tpu_custom_call.1} parent=1 // pred_fallthru
      _
    // Predicated region
    $region26: #{tpu_custom_call.1} parent=1 // pred_check
      _
    $region27: #{tpu_custom_call.1} parent=1 // pred_check_branch
      %67 = sbr.rel (0) target = $region29
    $region28: #{tpu_custom_call.1} parent=1 // pred_region
      _
    $region29: #{tpu_custom_call.1} parent=1 // pred_fallthru
      _
    // Predicated region
    $region30: #{tpu_custom_call.1} parent=1 // pred_check
      _
    $region31: #{tpu_custom_call.1} parent=1 // pred_check_branch
      %69 = sbr.rel (0) target = $region33
    $region32: #{tpu_custom_call.1} parent=1 // pred_region
      %70 = dma.done [#allocation3], 128
    $region33: #{tpu_custom_call.1} parent=1 // pred_fallthru
      _
    // Predicated region
    $region34: #{tpu_custom_call.1} parent=1 // pred_check
      _
    $region35: #{tpu_custom_call.1} parent=1 // pred_check_branch
      %72 = sbr.rel (0) target = $region37
    $region36: #{tpu_custom_call.1} parent=1 // pred_region
      %73 = dma.done [#allocation6], 512
    $region37: #{tpu_custom_call.1} parent=1 // pred_fallthru
      _
    // Predicated region
    $region38: #{tpu_custom_call.1} parent=1 // pred_check
      _
    $region39: #{tpu_custom_call.1} parent=1 // pred_check_branch
      %75 = sbr.rel (0) target = $region41
    $region40: #{tpu_custom_call.1} parent=1 // pred_region
      %76 = dma.done [#allocation6], 2048
    $region41: #{tpu_custom_call.1} parent=1 // pred_fallthru
      _
    // Predicated region
    $region42: #{tpu_custom_call.1} parent=1 // pred_check
      _
    $region43: #{tpu_custom_call.1} parent=1 // pred_check_branch
      %78 = sbr.rel (0) target = $region45
    $region44: #{tpu_custom_call.1} parent=1 // pred_region
      %79 = dma.done [#allocation9], 2048
    $region45: #{tpu_custom_call.1} parent=1 // pred_fallthru
      _
    %v80 = vld [vmem:[#allocation2] sm:$0xff]
    %v81 = vld [vmem:[#allocation5] sm:$0xff]
    %v82 = vld [vmem:[#allocation5 + $0x8] sm:$0xff]
    %v83 = vld [vmem:[#allocation5 + $0x10] sm:$0xff]
    %v84 = vld [vmem:[#allocation5 + $0x18] sm:$0xff]
    %v85 = vld [vmem:[%s2] sm:$0x1]
    %v87 = vlaneseq
    %v88 = vshrl.u32 %v87, 7
    %v89 = vsub.s32 0, %v88
    %v90 = vrot.slane %v85, %v89
    %vm92 = vcmask 261120
    %v94 = vsel %vm92, %v80, 0
    %96 = vmatprep.subr.mxu0 0.0
    %97 = vmatpush1.msra.mxu0 0.0
    %98 = vmatprep.subr.mxu0 0.0
    %99 = vmatpush1.msra.mxu0 0.0
    %100 = vmatprep.subr.mxu0 0.0
    %101 = vmatpush1.msra.mxu0 0.0
    %102 = vmatprep.subr.mxu0 0.0
    %103 = vmatpush1.msra.mxu0 0.0
    %104 = vmatprep.subr.mxu0 0.0
    %105 = vmatpush1.msra.mxu0 0.0
    %106 = vmatprep.subr.mxu0 0.0
    %107 = vmatpush1.msra.mxu0 0.0
    %108 = vmatprep.subr.mxu0 0.0
    %109 = vmatpush1.msra.mxu0 0.0
    %110 = vmatprep.subr.mxu0 0.0
    %111 = vmatpush1.msra.mxu0 0.0
    %112 = vmatprep.subr.mxu0 0.0
    %113 = vmatpush1.msra.mxu0 0.0
    %114 = vmatprep.subr.mxu0 0.0
    %115 = vmatpush1.msra.mxu0 0.0
    %116 = vmatprep.subr.mxu0 0.0
    %117 = vmatpush1.msra.mxu0 0.0
    %118 = vmatprep.subr.mxu0 0.0
    %119 = vmatpush1.msra.mxu0 0.0
    %120 = vmatprep.subr.mxu0 0.0
    %121 = vmatpush1.msra.mxu0 %v84
    %122 = vmatprep.subr.mxu0 0.0
    %123 = vmatpush1.msra.mxu0 %v83
    %124 = vmatprep.subr.mxu0 0.0
    %125 = vmatpush1.msra.mxu0 %v82
    %126 = vmatprep.subr.mxu0 0.0
    %127 = vmatpush1.msra.mxu0 %v81
    %128 = vmatprep.subr.mxu0 0.0
    %129 = vmatpush2.msra.mxu0 0.0
    %130 = vmatprep.subr.mxu0 0.0
    %131 = vmatpush2.msra.mxu0 0.0
    %132 = vmatprep.subr.mxu0 0.0
    %133 = vmatpush2.msra.mxu0 0.0
    %134 = vmatprep.subr.mxu0 0.0
    %135 = vmatpush2.msra.mxu0 0.0
    %136 = vmatprep.subr.mxu0 0.0
    %137 = vmatpush2.msra.mxu0 0.0
    %138 = vmatprep.subr.mxu0 0.0
    %139 = vmatpush2.msra.mxu0 0.0
    %140 = vmatprep.subr.mxu0 0.0
    %141 = vmatpush2.msra.mxu0 0.0
    %142 = vmatprep.subr.mxu0 0.0
    %143 = vmatpush2.msra.mxu0 0.0
    %144 = vmatprep.subr.mxu0 0.0
    %145 = vmatpush2.msra.mxu0 0.0
    %146 = vmatprep.subr.mxu0 0.0
    %147 = vmatpush2.msra.mxu0 0.0
    %148 = vmatprep.subr.mxu0 0.0
    %149 = vmatpush2.msra.mxu0 0.0
    %150 = vmatprep.subr.mxu0 0.0
    %151 = vmatpush2.msra.mxu0 0.0
    %152 = vmatprep.subr.mxu0 0.0
    %153 = vmatpush2.msra.mxu0 0.0
    %154 = vmatprep.subr.mxu0 0.0
    %155 = vmatpush2.msra.mxu0 0.0
    %156 = vmatprep.subr.mxu0 0.0
    %157 = vmatpush2.msra.mxu0 0.0
    %158 = vmatprep.subr.mxu0 0.0
    %159 = vmatpush2.msra.mxu0 0.0
    %160 = vmatprep.mubr.f32.mxu0 0.0
    %161 = vmatmul.mubr.f32.gmra.mxu0 %v94
    %v162 = vpop.f32.mrf.mxu0
    %v163 = vadd.f32 %v90, %v162
    %v164 = vpop.f32.mrf.mxu0
    %165 = vdwg.mxu0
    %v166 = vxor.u32 %v163, 2147483648
    %v167 = vmul.f32 %v166, 1.442695
    %v168 = vpow.pop %v167
    %v169 = vadd.f32 %v168, 1.0
    %v170 = vrcp.pop %v169
    %v171 = vmul.f32 1.0, %v170
    %v172 = vmul.f32 %v163, %v171
    %v173 = vld [vmem:[#allocation7] sm:$0xff]
    %v174 = vld [vmem:[#allocation7 + $0x8] sm:$0xff]
    %v175 = vld [vmem:[#allocation7 + $0x10] sm:$0xff]
    %v176 = vld [vmem:[#allocation7 + $0x18] sm:$0xff]
    %v177 = vld [vmem:[#allocation7 + $0x20] sm:$0xff]
    %v178 = vld [vmem:[#allocation7 + $0x28] sm:$0xff]
    %v179 = vld [vmem:[#allocation7 + $0x30] sm:$0xff]
    %v180 = vld [vmem:[#allocation7 + $0x38] sm:$0xff]
    %v181 = vld [vmem:[#allocation7 + $0x40] sm:$0xff]
    %v182 = vld [vmem:[#allocation7 + $0x48] sm:$0xff]
    %v183 = vld [vmem:[#allocation7 + $0x50] sm:$0xff]
    %v184 = vld [vmem:[#allocation7 + $0x58] sm:$0xff]
    %v185 = vld [vmem:[#allocation7 + $0x60] sm:$0xff]
    %v186 = vld [vmem:[#allocation7 + $0x68] sm:$0xff]
    %v187 = vld [vmem:[#allocation7 + $0x70] sm:$0xff]
    %v188 = vld [vmem:[#allocation7 + $0x78] sm:$0xff]
    %v189 = vld [vmem:[%s4] sm:$0x1]
    %v191 = vlaneseq
    %v192 = vshrl.u32 %v191, 7
    %v193 = vsub.s32 0, %v192
    %v194 = vrot.slane %v189, %v193
    %196 = vmatprep.subr.mxu0 0.0
    %197 = vmatpush1.msra.mxu0 %v188
    %198 = vmatprep.subr.mxu0 0.0
    %199 = vmatpush1.msra.mxu0 %v187
    %200 = vmatprep.subr.mxu0 0.0
    %201 = vmatpush1.msra.mxu0 %v186
    %202 = vmatprep.subr.mxu0 0.0
    %203 = vmatpush1.msra.mxu0 %v185
    %204 = vmatprep.subr.mxu0 0.0
    %205 = vmatpush1.msra.mxu0 %v184
    %206 = vmatprep.subr.mxu0 0.0
    %207 = vmatpush1.msra.mxu0 %v183
    %208 = vmatprep.subr.mxu0 0.0
    %209 = vmatpush1.msra.mxu0 %v182
    %210 = vmatprep.subr.mxu0 0.0
    %211 = vmatpush1.msra.mxu0 %v181
    %212 = vmatprep.subr.mxu0 0.0
    %213 = vmatpush1.msra.mxu0 %v180
    %214 = vmatprep.subr.mxu0 0.0
    %215 = vmatpush1.msra.mxu0 %v179
    %216 = vmatprep.subr.mxu0 0.0
    %217 = vmatpush1.msra.mxu0 %v178
    %218 = vmatprep.subr.mxu0 0.0
    %219 = vmatpush1.msra.mxu0 %v177
    %220 = vmatprep.subr.mxu0 0.0
    %221 = vmatpush1.msra.mxu0 %v176
    %222 = vmatprep.subr.mxu0 0.0
    %223 = vmatpush1.msra.mxu0 %v175
    %224 = vmatprep.subr.mxu0 0.0
    %225 = vmatpush1.msra.mxu0 %v174
    %226 = vmatprep.subr.mxu0 0.0
    %227 = vmatpush1.msra.mxu0 %v173
    %228 = vmatprep.subr.mxu0 0.0
    %229 = vmatpush2.msra.mxu0 0.0
    %230 = vmatprep.subr.mxu0 0.0
    %231 = vmatpush2.msra.mxu0 0.0
    %232 = vmatprep.subr.mxu0 0.0
    %233 = vmatpush2.msra.mxu0 0.0
    %234 = vmatprep.subr.mxu0 0.0
    %235 = vmatpush2.msra.mxu0 0.0
    %236 = vmatprep.subr.mxu0 0.0
    %237 = vmatpush2.msra.mxu0 0.0
    %238 = vmatprep.subr.mxu0 0.0
    %239 = vmatpush2.msra.mxu0 0.0
    %240 = vmatprep.subr.mxu0 0.0
    %241 = vmatpush2.msra.mxu0 0.0
    %242 = vmatprep.subr.mxu0 0.0
    %243 = vmatpush2.msra.mxu0 0.0
    %244 = vmatprep.subr.mxu0 0.0
    %245 = vmatpush2.msra.mxu0 0.0
    %246 = vmatprep.subr.mxu0 0.0
    %247 = vmatpush2.msra.mxu0 0.0
    %248 = vmatprep.subr.mxu0 0.0
    %249 = vmatpush2.msra.mxu0 0.0
    %250 = vmatprep.subr.mxu0 0.0
    %251 = vmatpush2.msra.mxu0 0.0
    %252 = vmatprep.subr.mxu0 0.0
    %253 = vmatpush2.msra.mxu0 0.0
    %254 = vmatprep.subr.mxu0 0.0
    %255 = vmatpush2.msra.mxu0 0.0
    %256 = vmatprep.subr.mxu0 0.0
    %257 = vmatpush2.msra.mxu0 0.0
    %258 = vmatprep.subr.mxu0 0.0
    %259 = vmatpush2.msra.mxu0 0.0
    %260 = vmatprep.mubr.f32.mxu0 0.0
    %261 = vmatmul.mubr.f32.gmra.mxu0 %v172
    %v262 = vpop.f32.mrf.mxu0
    %v263 = vadd.f32 %v194, %v262
    %v264 = vpop.f32.mrf.mxu0
    %265 = vdwg.mxu0
    %v266 = vxor.u32 %v263, 2147483648
    %v267 = vmul.f32 %v266, 1.442695
    %v268 = vpow.pop %v267
    %v269 = vadd.f32 %v268, 1.0
    %v270 = vrcp.pop %v269
    %v271 = vmul.f32 1.0, %v270
    %v272 = vmul.f32 %v263, %v271
    %v273 = vld [vmem:[#allocation8] sm:$0xff]
    %v274 = vld [vmem:[#allocation8 + $0x8] sm:$0xff]
    %v275 = vld [vmem:[#allocation8 + $0x10] sm:$0xff]
    %v276 = vld [vmem:[#allocation8 + $0x18] sm:$0xff]
    %v277 = vld [vmem:[#allocation8 + $0x20] sm:$0xff]
    %v278 = vld [vmem:[#allocation8 + $0x28] sm:$0xff]
    %v279 = vld [vmem:[#allocation8 + $0x30] sm:$0xff]
    %v280 = vld [vmem:[#allocation8 + $0x38] sm:$0xff]
    %v281 = vld [vmem:[#allocation8 + $0x40] sm:$0xff]
    %v282 = vld [vmem:[#allocation8 + $0x48] sm:$0xff]
    %v283 = vld [vmem:[#allocation8 + $0x50] sm:$0xff]
    %v284 = vld [vmem:[#allocation8 + $0x58] sm:$0xff]
    %v285 = vld [vmem:[#allocation8 + $0x60] sm:$0xff]
    %v286 = vld [vmem:[#allocation8 + $0x68] sm:$0xff]
    %v287 = vld [vmem:[#allocation8 + $0x70] sm:$0xff]
    %v288 = vld [vmem:[#allocation8 + $0x78] sm:$0xff]
    %v289 = vld [vmem:[%s6] sm:$0x1]
    %v291 = vlaneseq
    %v292 = vshrl.u32 %v291, 7
    %v293 = vsub.s32 0, %v292
    %v294 = vrot.slane %v289, %v293
    %296 = vmatprep.subr.mxu0 0.0
    %297 = vmatpush1.msra.mxu0 %v288
    %298 = vmatprep.subr.mxu0 0.0
    %299 = vmatpush1.msra.mxu0 %v287
    %300 = vmatprep.subr.mxu0 0.0
    %301 = vmatpush1.msra.mxu0 %v286
    %302 = vmatprep.subr.mxu0 0.0
    %303 = vmatpush1.msra.mxu0 %v285
    %304 = vmatprep.subr.mxu0 0.0
    %305 = vmatpush1.msra.mxu0 %v284
    %306 = vmatprep.subr.mxu0 0.0
    %307 = vmatpush1.msra.mxu0 %v283
    %308 = vmatprep.subr.mxu0 0.0
    %309 = vmatpush1.msra.mxu0 %v282
    %310 = vmatprep.subr.mxu0 0.0
    %311 = vmatpush1.msra.mxu0 %v281
    %312 = vmatprep.subr.mxu0 0.0
    %313 = vmatpush1.msra.mxu0 %v280
    %314 = vmatprep.subr.mxu0 0.0
    %315 = vmatpush1.msra.mxu0 %v279
    %316 = vmatprep.subr.mxu0 0.0
    %317 = vmatpush1.msra.mxu0 %v278
    %318 = vmatprep.subr.mxu0 0.0
    %319 = vmatpush1.msra.mxu0 %v277
    %320 = vmatprep.subr.mxu0 0.0
    %321 = vmatpush1.msra.mxu0 %v276
    %322 = vmatprep.subr.mxu0 0.0
    %323 = vmatpush1.msra.mxu0 %v275
    %324 = vmatprep.subr.mxu0 0.0
    %325 = vmatpush1.msra.mxu0 %v274
    %326 = vmatprep.subr.mxu0 0.0
    %327 = vmatpush1.msra.mxu0 %v273
    %328 = vmatprep.subr.mxu0 0.0
    %329 = vmatpush2.msra.mxu0 0.0
    %330 = vmatprep.subr.mxu0 0.0
    %331 = vmatpush2.msra.mxu0 0.0
    %332 = vmatprep.subr.mxu0 0.0
    %333 = vmatpush2.msra.mxu0 0.0
    %334 = vmatprep.subr.mxu0 0.0
    %335 = vmatpush2.msra.mxu0 0.0
    %336 = vmatprep.subr.mxu0 0.0
    %337 = vmatpush2.msra.mxu0 0.0
    %338 = vmatprep.subr.mxu0 0.0
    %339 = vmatpush2.msra.mxu0 0.0
    %340 = vmatprep.subr.mxu0 0.0
    %341 = vmatpush2.msra.mxu0 0.0
    %342 = vmatprep.subr.mxu0 0.0
    %343 = vmatpush2.msra.mxu0 0.0
    %344 = vmatprep.subr.mxu0 0.0
    %345 = vmatpush2.msra.mxu0 0.0
    %346 = vmatprep.subr.mxu0 0.0
    %347 = vmatpush2.msra.mxu0 0.0
    %348 = vmatprep.subr.mxu0 0.0
    %349 = vmatpush2.msra.mxu0 0.0
    %350 = vmatprep.subr.mxu0 0.0
    %351 = vmatpush2.msra.mxu0 0.0
    %352 = vmatprep.subr.mxu0 0.0
    %353 = vmatpush2.msra.mxu0 0.0
    %354 = vmatprep.subr.mxu0 0.0
    %355 = vmatpush2.msra.mxu0 0.0
    %356 = vmatprep.subr.mxu0 0.0
    %357 = vmatpush2.msra.mxu0 0.0
    %358 = vmatprep.subr.mxu0 0.0
    %359 = vmatpush2.msra.mxu0 0.0
    %360 = vmatprep.mubr.f32.mxu0 0.0
    %361 = vmatmul.mubr.f32.gmra.mxu0 %v272
    %v362 = vpop.f32.mrf.mxu0
    %v363 = vadd.f32 %v294, %v362
    %v364 = vpop.f32.mrf.mxu0
    %365 = vdwg.mxu0
    %366 = vst [vmem:[#allocation10] sm:$0xff] %v363
    // Predicated region
    $region46: #{tpu_custom_call.1} parent=1 // pred_check
      _
    $region47: #{tpu_custom_call.1} parent=1 // pred_check_branch
      %368 = sbr.rel (0) target = $region49
    $region48: #{tpu_custom_call.1} parent=1 // pred_region
      %s370 = ssub.s32 128, 128
      %371 = vsyncadd [#allocation4], %s370
      %s373 = sshll.u32 [#allocation10], 4
      %s374 = int_to_ptr.vmem [resolvable:$true] %s373
      %376 = dma.vmem_to_hbm [thread:$0]  %s374, 128, %s7, [#allocation4]
    $region49: #{tpu_custom_call.1} parent=1 // pred_fallthru
      _
    // Predicated region
    $region50: #{tpu_custom_call.1} parent=1 // pred_check
      _
    $region51: #{tpu_custom_call.1} parent=1 // pred_check_branch
      %378 = sbr.rel (0) target = $region53
    $region52: #{tpu_custom_call.1} parent=1 // pred_region
      %379 = dma.done [#allocation4], 128
    $region53: #{tpu_custom_call.1} parent=1 // pred_fallthru
      _
    %380 = vsyncpa [#allocation3], 1
    %381 = vsyncpa [#allocation6], 1
    %382 = vsyncpa [#allocation9], 1
    %383 = vsyncpa [#allocation4], 1

</llo_original>
